<compile_context>
chip_gen: v7x
topology: tpu7x:2x2x1
jax: 0.10.0
libtpu: 0.0.40
codegen_flags: <defaults>
</compile_context>

<pallas_src>
import numpy as np
import jax
import jax.numpy as jnp
from jax.experimental import pallas as pl
from jax.experimental.pallas import tpu as pltpu

BANDS = [(1, 4), (4, 8), (8, 13), (13, 30), (30, 45)]
FEAT_DIM = 16
SFREQ = 200.0
LANE = 128
MAX_TILE_N = 512   # rows per grid step (upper bound)


def _round_up(n, m):
    return ((n + m - 1) // m) * m


def _choose_row_tile(n_rows, max_tile=MAX_TILE_N):
    """Rows per grid step (multiple of 8 = f32 sublane granularity).

    Large tiles amortize the ~0.35 us/step pipeline overhead; for moderate row
    counts keep two balanced steps so the 'parallel' grid axis can be sharded
    across both v7x TensorCores (perf-neutral on v5e/v6e)."""
    if n_rows > max_tile:
        return max_tile
    if n_rows >= 256:
        return _round_up((n_rows + 1) // 2, 8)
    return _round_up(max(n_rows, 1), 8)


def spectral_kernel(x_ref, cs_ref, fw_ref, b_ref, o_ref):
    """real-DFT -> |.|^2 -> (band-mean o fc) -> bias -> ELU for one row tile."""
    # Stream x as f32 and cast on the VPU (halves x HBM traffic vs a wrapper cast).
    xb = x_ref[...].astype(jnp.bfloat16)
    # Single lane-dense DFT matmul over [cos|sin] of the band-covered
    # frequencies only; the 1/T PSD normalization is folded in as 1/sqrt(T).
    z = jnp.dot(xb, cs_ref[...], preferred_element_type=jnp.float32)
    # re^2+im^2, band-averaging and fc are all folded into fw_ref: each used
    # frequency's fused row appears once under its cos column and once under
    # its sin column, so this matmul sums re^2+im^2 while applying the weights.
    # Default precision (single bf16 MXU pass, f32 accumulation) — HIGH dropped.
    y = jnp.dot(z * z, fw_ref[...],
                preferred_element_type=jnp.float32) + b_ref[...]
    # ELU(alpha=1). exp(y)-1 kept (guaranteed Mosaic lowering); expm1's extra
    # precision near y~0 is ~1e-7, far below tolerance.
    # TODO(synk): switch to jnp.expm1 once confirmed in the Mosaic lowering table.
    o_ref[...] = jnp.where(y > 0, y, jnp.exp(y) - 1.0)


def spectral_branch(x, w, b, bands=BANDS, sfreq=SFREQ, feat_dim=FEAT_DIM,
                    max_tile=MAX_TILE_N):
    """x: (B, C, T) float; w: (feat_dim, n_bands) (PyTorch fc.weight); b: (feat_dim,)."""
    B, C, T = x.shape
    F_ = T // 2 + 1

    # ---- host-side constant construction (exact, float64) ----
    freqs = np.arange(F_, dtype=np.float64) * (sfreq / T)        # rfftfreq
    used = np.zeros(F_, dtype=bool)
    cols = []
    for f1, f2 in bands:
        m = (freqs >= f1) & (freqs < f2)
        used |= m
        cnt = int(m.sum())
        # Empty band -> NaN mean, matching torch .mean() over an empty slice
        # (note: fc mixes all bands, so this NaNs every output feature).
        cols.append(m.astype(np.float64) / cnt if cnt > 0
                    else np.full(F_, np.nan))
    if not used.any():
        used[:] = True                                           # degenerate guard
    idx = np.nonzero(used)[0]                                    # freqs that matter
    band_mat = np.stack(cols, axis=1)[idx]                       # (f_used, NB)
    f_used = idx.size
    w_pad = _round_up(2 * f_used, LANE)          # cos|sin packed contiguously

    # Real-DFT matrix restricted to used freqs; 1/sqrt(T) folds the 1/T PSD norm.
    t = np.arange(T, dtype=np.float64)[:, None]
    ang = 2.0 * np.pi * t * idx[None, :] / T
    scale = 1.0 / np.sqrt(T)
    cs = np.zeros((T, w_pad), dtype=np.float64)
    cs[:, :f_used] = np.cos(ang) * scale
    cs[:, f_used:2 * f_used] = np.sin(ang) * scale
    cs_mat = jnp.asarray(cs, jnp.bfloat16)                       # (T, w_pad)
    # TODO(synk): keep cs in f32 (or a bf16x3 split) if T grows or tolerance tightens.

    # Fold band-mean and fc into one (w_pad, feat) matrix; each used frequency's
    # fused row is duplicated under its cos and its sin column (=> re^2+im^2).
    fused = band_mat @ np.asarray(w, np.float64).T               # (f_used, feat)
    fw2 = np.zeros((w_pad, feat_dim), dtype=np.float64)
    fw2[:f_used] = fused
    fw2[f_used:2 * f_used] = fused
    fw_mat = jnp.asarray(fw2, jnp.float32)
    b2 = jnp.asarray(b, jnp.float32).reshape(1, feat_dim)

    # ---- rows: N = B*C, streamed in f32, no wrapper cast/pad HBM pass ----
    N = B * C
    xf = x.reshape(N, T)                     # free reshape (view), no HBM pass
    tile_n = _choose_row_tile(N, max_tile)
    grid = (pl.cdiv(N, tile_n),)

    out = pl.pallas_call(
        spectral_kernel,
        out_shape=jax.ShapeDtypeStruct((N, feat_dim), jnp.float32),
        grid=grid,
        in_specs=[
            pl.BlockSpec((tile_n, T), lambda i: (i, 0)),         # streamed x tile
            # Constants: constant index_map keeps them VMEM-resident (no re-DMA).
            # TODO(synk): pipeline_mode=pl.Buffered(1) would halve their VMEM
            # footprint (matters for large T on v7x) once confirmed supported.
            pl.BlockSpec((T, w_pad), lambda i: (0, 0)),
            pl.BlockSpec((w_pad, feat_dim), lambda i: (0, 0)),
            pl.BlockSpec((1, feat_dim), lambda i: (0, 0)),
        ],
        out_specs=pl.BlockSpec((tile_n, feat_dim), lambda i: (i, 0)),
        compiler_params=pltpu.CompilerParams(
            dimension_semantics=("parallel",),
            vmem_limit_bytes=32 * 1024 * 1024),
    )(xf, cs_mat, fw_mat, b2)

    return out.reshape(B, C, feat_dim)


def reference(x, w, b, bands=BANDS, sfreq=SFREQ):
    """Plain-JAX reference mirroring the PyTorch forward."""
    B, C, T = x.shape
    X = jnp.fft.rfft(x, axis=2)
    psd = jnp.abs(X) ** 2 / T
    freqs = np.arange(T // 2 + 1) * (sfreq / T)
    outs = []
    for f1, f2 in bands:
        m = (freqs >= f1) & (freqs < f2)
        outs.append(psd[:, :, m].mean(axis=2))
    s = jnp.stack(outs, axis=2)
    y = s @ jnp.asarray(w).T + jnp.asarray(b)
    return jnp.where(y > 0, y, jnp.exp(y) - 1.0)


if __name__ == "__main__":
    B, C, T = 2, 4, 64   # T=64 @ 200 Hz -> 3.125 Hz bins, every band non-empty
    key = jax.random.PRNGKey(0)
    kx, kw, kb = jax.random.split(key, 3)

    x = jax.random.normal(kx, (B, C, T), jnp.float32)
    bound = 1.0 / np.sqrt(len(BANDS))   # PyTorch nn.Linear default init bounds
    w = jax.random.uniform(kw, (FEAT_DIM, len(BANDS)), jnp.float32, -bound, bound)
    b = jax.random.uniform(kb, (FEAT_DIM,), jnp.float32, -bound, bound)

    out = jax.block_until_ready(spectral_branch(x, w, b))

    ref = reference(x, w, b)
    np.testing.assert_allclose(np.asarray(out), np.asarray(ref),
                               rtol=2e-2, atol=2e-2)
    print("KERNEL_OK")
</pallas_src>

<mosaic_0001>
module attributes {stable_mosaic.version = 11 : i64} {
  func.func @spectral_kernel(%arg0: i32, %arg1: memref<8x64xf32, #tpu.memory_space<vmem>>, %arg2: memref<64x128xbf16, #tpu.memory_space<vmem>>, %arg3: memref<128x16xf32, #tpu.memory_space<vmem>>, %arg4: memref<1x16xf32, #tpu.memory_space<vmem>>, %arg5: memref<8x16xf32, #tpu.memory_space<vmem>>) attributes {dimension_semantics = [#tpu.dimension_semantics<parallel>], iteration_bounds = array<i64: 1>, scalar_prefetch = 0 : i64, scratch_operands = 0 : i64, tpu.core_type = #tpu.core_type<tc>, window_params = [{transform_indices = @transform_0, window_bounds = array<i64: 8, 64>}, {pipeline_mode = #tpu.pipeline_mode<synchronous>, transform_indices = @transform_1, window_bounds = array<i64: 64, 128>}, {pipeline_mode = #tpu.pipeline_mode<synchronous>, transform_indices = @transform_2, window_bounds = array<i64: 128, 16>}, {pipeline_mode = #tpu.pipeline_mode<synchronous>, transform_indices = @transform_3, window_bounds = array<i64: 1, 16>}, {transform_indices = @transform_4, window_bounds = array<i64: 8, 16>}]} {
    %c0 = arith.constant 0 : index
    %c0_0 = arith.constant 0 : index
    %0 = vector.load %arg1[%c0, %c0_0] : memref<8x64xf32, #tpu.memory_space<vmem>>, vector<8x64xf32>
    %1 = arith.truncf %0 : vector<8x64xf32> to vector<8x64xbf16>
    %c0_1 = arith.constant 0 : index
    %c0_2 = arith.constant 0 : index
    %2 = vector.load %arg2[%c0_1, %c0_2] : memref<64x128xbf16, #tpu.memory_space<vmem>>, vector<64x128xbf16>
    %cst = arith.constant dense<0.000000e+00> : vector<8x128xf32>
    %3 = tpu.matmul %1, %2, %cst {dimension_numbers = #tpu.dot_dimension_numbers<[1], [0], [0], [1], [0, 0, 1, 1], [], []>} : vector<8x64xbf16>, vector<64x128xbf16>, vector<8x128xf32> -> vector<8x128xf32>
    %4 = arith.mulf %3, %3 : vector<8x128xf32>
    %c0_3 = arith.constant 0 : index
    %c0_4 = arith.constant 0 : index
    %5 = vector.load %arg3[%c0_3, %c0_4] : memref<128x16xf32, #tpu.memory_space<vmem>>, vector<128x16xf32>
    %cst_5 = arith.constant dense<0.000000e+00> : vector<8x16xf32>
    %6 = tpu.matmul %4, %5, %cst_5 {dimension_numbers = #tpu.dot_dimension_numbers<[1], [0], [0], [1], [0, 0, 1, 1], [], []>} : vector<8x128xf32>, vector<128x16xf32>, vector<8x16xf32> -> vector<8x16xf32>
    %c0_6 = arith.constant 0 : index
    %c0_7 = arith.constant 0 : index
    %7 = vector.load %arg4[%c0_6, %c0_7] : memref<1x16xf32, #tpu.memory_space<vmem>>, vector<1x16xf32>
    %8 = vector.broadcast %7 : vector<1x16xf32> to vector<8x16xf32>
    %9 = arith.addf %6, %8 : vector<8x16xf32>
    %cst_8 = arith.constant 0.000000e+00 : f32
    %10 = vector.broadcast %cst_8 : f32 to vector<8x16xf32>
    %11 = arith.cmpf ogt, %9, %10 : vector<8x16xf32>
    %12 = math.exp %9 : vector<8x16xf32>
    %cst_9 = arith.constant 1.000000e+00 : f32
    %13 = vector.broadcast %cst_9 : f32 to vector<8x16xf32>
    %14 = arith.subf %12, %13 : vector<8x16xf32>
    %15 = arith.select %11, %9, %14 : vector<8x16xi1>, vector<8x16xf32>
    %c0_10 = arith.constant 0 : index
    %c0_11 = arith.constant 0 : index
    %16 = vector.load %arg5[%c0_10, %c0_11] : memref<8x16xf32, #tpu.memory_space<vmem>>, vector<8x16xf32>
    tpu.vector_store %arg5[%c0_10, %c0_11], %15 {strides = array<i32>} : memref<8x16xf32, #tpu.memory_space<vmem>>, vector<8x16xf32>,
    return
  }
  func.func @transform_0(%arg0: i32) -> (i32, i32) {
    %c0_i32 = arith.constant 0 : i32
    %c0_i32_0 = arith.constant 0 : i32
    return %arg0, %c0_i32 : i32, i32
  }
  func.func @transform_1(%arg0: i32) -> (i32, i32) {
    %c0_i32 = arith.constant 0 : i32
    %c0_i32_0 = arith.constant 0 : i32
    %c0_i32_1 = arith.constant 0 : i32
    return %c0_i32, %c0_i32_0 : i32, i32
  }
  func.func @transform_2(%arg0: i32) -> (i32, i32) {
    %c0_i32 = arith.constant 0 : i32
    %c0_i32_0 = arith.constant 0 : i32
    %c0_i32_1 = arith.constant 0 : i32
    return %c0_i32, %c0_i32_0 : i32, i32
  }
  func.func @transform_3(%arg0: i32) -> (i32, i32) {
    %c0_i32 = arith.constant 0 : i32
    %c0_i32_0 = arith.constant 0 : i32
    %c0_i32_1 = arith.constant 0 : i32
    return %c0_i32, %c0_i32_0 : i32, i32
  }
  func.func @transform_4(%arg0: i32) -> (i32, i32) {
    %c0_i32 = arith.constant 0 : i32
    %c0_i32_0 = arith.constant 0 : i32
    return %arg0, %c0_i32 : i32, i32
  }
}

</mosaic_0001>

<llo_original>
// kernel: tpu_custom_call.1
$region0: #{tpu_custom_call.1}
  #allocation0 [shape = 'u32[]', space=smem, size = 0x4, offset = 0x4, fixed_abs, tag = 'smem constant byte address 0x4 - core index']
  #allocation1 [shape = 'u32[144,128]{1,0:T(1,128)}', space=vmem, size = 0x12000, scoped, tag = 'internal scratch']
  %s0 = inlined_call_operand.vmem [shape: f32[8,64], index: 0, kind: input, shape index: {}]
  %s1 = inlined_call_operand.vmem [shape: bf16[64,128], index: 1, kind: input, shape index: {}]
  %s2 = inlined_call_operand.vmem [shape: f32[128,16], index: 2, kind: input, shape index: {}]
  %s3 = inlined_call_operand.vmem [shape: f32[1,16], index: 3, kind: input, shape index: {}]
  %s4 = inlined_call_operand.hbm [shape: f32[8,16], index: 4, kind: output, shape index: {}]
  %s5 = sld [smem:[#allocation0]]
  $region26: #{tpu_custom_call.1} parent=0
    _
  %s7 = ssub.s32 1, %s5
  %s8 = scalar_select 0, %s7, %s5
  $region1: #{tpu_custom_call.1} parent=0
    #allocation2 [shape = 'u8[4096]{0}', space=vmem, size = 0x1000, scoped, tag = 'output window, operand 0, single buffered']
    #allocation3 [shape = 's32[1]{0}', space=sflag, size = 0x4, scoped, tag = 'scoped memory for tpu_custom_call.1']
    %9 = vsyncpa [#allocation3], 0
    // Predicated region
    $region2: #{tpu_custom_call.1} parent=1 // pred_check
      _
    $region3: #{tpu_custom_call.1} parent=1 // pred_check_branch
      %11 = sbr.rel (0) target = $region5
    $region4: #{tpu_custom_call.1} parent=1 // pred_region
      _
    $region5: #{tpu_custom_call.1} parent=1 // pred_fallthru
      _
    // Predicated region
    $region6: #{tpu_custom_call.1} parent=1 // pred_check
      _
    $region7: #{tpu_custom_call.1} parent=1 // pred_check_branch
      %13 = sbr.rel (0) target = $region9
    $region8: #{tpu_custom_call.1} parent=1 // pred_region
      _
    $region9: #{tpu_custom_call.1} parent=1 // pred_fallthru
      _
    // Predicated region
    $region10: #{tpu_custom_call.1} parent=1 // pred_check
      _
    $region11: #{tpu_custom_call.1} parent=1 // pred_check_branch
      %15 = sbr.rel (0) target = $region13
    $region12: #{tpu_custom_call.1} parent=1 // pred_region
      _
    $region13: #{tpu_custom_call.1} parent=1 // pred_fallthru
      _
    // Predicated region
    $region14: #{tpu_custom_call.1} parent=1 // pred_check
      _
    $region15: #{tpu_custom_call.1} parent=1 // pred_check_branch
      %17 = sbr.rel (0) target = $region17
    $region16: #{tpu_custom_call.1} parent=1 // pred_region
      _
    $region17: #{tpu_custom_call.1} parent=1 // pred_fallthru
      _
    %v19 = vld [vmem:[%s0] sm:$0xff]
    %v20 = vpack.c.bf16 %v19, %v19
    %v21 = vld [vmem:[%s1] sm:$0xf]
    %v22 = vld [vmem:[%s1 + $0x4] sm:$0xf]
    %v23 = vld [vmem:[%s1 + $0x8] sm:$0xf]
    %v24 = vld [vmem:[%s1 + $0xc] sm:$0xf]
    %v25 = vld [vmem:[%s1 + $0x10] sm:$0xf]
    %v26 = vld [vmem:[%s1 + $0x14] sm:$0xf]
    %v27 = vld [vmem:[%s1 + $0x18] sm:$0xf]
    %v28 = vld [vmem:[%s1 + $0x1c] sm:$0xf]
    %v37 = vunpack.c.l.b16 %v21
    %v38 = vunpack.c.l.b16 %v22
    %v39 = vunpack.c.l.b16 %v23
    %v40 = vunpack.c.l.b16 %v24
    %v41 = vunpack.c.l.b16 %v25
    %v42 = vunpack.c.l.b16 %v26
    %v43 = vunpack.c.l.b16 %v27
    %v44 = vunpack.c.l.b16 %v28
    %v45 = vpack.c.b16 %v38, %v37
    %v46 = vpack.c.b16 %v40, %v39
    %v47 = vpack.c.b16 %v42, %v41
    %v48 = vpack.c.b16 %v44, %v43
    %vm53 = vcmask 523264
    %v55 = vsel %vm53, %v20, 0
    %57 = vmatprep.subr.bf16.mxu0 0
    %58 = vmatpush1.bf16.msra.mxu0 %v45
    %59 = vmatprep.subr.bf16.mxu0 0
    %60 = vmatpush1.bf16.msra.mxu0 %v46
    %61 = vmatprep.subr.bf16.mxu0 0
    %62 = vmatpush1.bf16.msra.mxu0 %v47
    %63 = vmatprep.subr.bf16.mxu0 0
    %64 = vmatpush1.bf16.msra.mxu0 %v48
    %65 = vmatprep.subr.bf16.mxu0 0
    %66 = vmatpush1.bf16.msra.mxu0 0
    %67 = vmatprep.subr.bf16.mxu0 0
    %68 = vmatpush1.bf16.msra.mxu0 0
    %69 = vmatprep.subr.bf16.mxu0 0
    %70 = vmatpush1.bf16.msra.mxu0 0
    %71 = vmatprep.subr.bf16.mxu0 0
    %72 = vmatpush1.bf16.msra.mxu0 0
    %73 = vmatprep.subr.bf16.mxu0 0
    %74 = vmatpush1.bf16.msra.mxu0 0
    %75 = vmatprep.subr.bf16.mxu0 0
    %76 = vmatpush1.bf16.msra.mxu0 0
    %77 = vmatprep.subr.bf16.mxu0 0
    %78 = vmatpush1.bf16.msra.mxu0 0
    %79 = vmatprep.subr.bf16.mxu0 0
    %80 = vmatpush1.bf16.msra.mxu0 0
    %81 = vmatprep.subr.bf16.mxu0 0
    %82 = vmatpush1.bf16.msra.mxu0 0
    %83 = vmatprep.subr.bf16.mxu0 0
    %84 = vmatpush1.bf16.msra.mxu0 0
    %85 = vmatprep.subr.bf16.mxu0 0
    %86 = vmatpush1.bf16.msra.mxu0 0
    %87 = vmatprep.subr.bf16.mxu0 0
    %88 = vmatpush1.bf16.msra.mxu0 0
    %89 = vmatprep.mubr.bf16.mxu0 0
    %90 = vmatmul.mubr.bf16.gmra.mrb[0].mxu0 %v55
    %v91 = vpop.f32.mrb[0].mxu0
    %v92 = vadd.f32 0.0, %v91
    %v93 = vpop.f32.mrb[0].mxu0
    %v94 = vpop.f32.mrb[0].mxu0
    %v95 = vpop.f32.mrb[0].mxu0
    %96 = vdwg.mxu0
    %v97 = vmul.f32 %v92, %v92
    %v98 = vld [vmem:[%s2] sm:$0xff]
    %v99 = vld [vmem:[%s2 + $0x8] sm:$0xff]
    %v100 = vld [vmem:[%s2 + $0x10] sm:$0xff]
    %v101 = vld [vmem:[%s2 + $0x18] sm:$0xff]
    %v102 = vld [vmem:[%s2 + $0x20] sm:$0xff]
    %v103 = vld [vmem:[%s2 + $0x28] sm:$0xff]
    %v104 = vld [vmem:[%s2 + $0x30] sm:$0xff]
    %v105 = vld [vmem:[%s2 + $0x38] sm:$0xff]
    %v106 = vld [vmem:[%s2 + $0x40] sm:$0xff]
    %v107 = vld [vmem:[%s2 + $0x48] sm:$0xff]
    %v108 = vld [vmem:[%s2 + $0x50] sm:$0xff]
    %v109 = vld [vmem:[%s2 + $0x58] sm:$0xff]
    %v110 = vld [vmem:[%s2 + $0x60] sm:$0xff]
    %v111 = vld [vmem:[%s2 + $0x68] sm:$0xff]
    %v112 = vld [vmem:[%s2 + $0x70] sm:$0xff]
    %v113 = vld [vmem:[%s2 + $0x78] sm:$0xff]
    %v114 = vld [vmem:[%s3] sm:$0x1]
    %v116 = vlaneseq
    %v117 = vshrl.u32 %v116, 7
    %v118 = vsub.s32 0, %v117
    %v119 = vrot.slane %v114, %v118
    %121 = vmatprep.subr.mxu0 0.0
    %122 = vmatpush1.msra.mxu0 %v98
    %123 = vmatprep.subr.mxu0 0.0
    %124 = vmatpush1.msra.mxu0 %v99
    %125 = vmatprep.subr.mxu0 0.0
    %126 = vmatpush1.msra.mxu0 %v100
    %127 = vmatprep.subr.mxu0 0.0
    %128 = vmatpush1.msra.mxu0 %v101
    %129 = vmatprep.subr.mxu0 0.0
    %130 = vmatpush1.msra.mxu0 %v102
    %131 = vmatprep.subr.mxu0 0.0
    %132 = vmatpush1.msra.mxu0 %v103
    %133 = vmatprep.subr.mxu0 0.0
    %134 = vmatpush1.msra.mxu0 %v104
    %135 = vmatprep.subr.mxu0 0.0
    %136 = vmatpush1.msra.mxu0 %v105
    %137 = vmatprep.subr.mxu0 0.0
    %138 = vmatpush1.msra.mxu0 %v106
    %139 = vmatprep.subr.mxu0 0.0
    %140 = vmatpush1.msra.mxu0 %v107
    %141 = vmatprep.subr.mxu0 0.0
    %142 = vmatpush1.msra.mxu0 %v108
    %143 = vmatprep.subr.mxu0 0.0
    %144 = vmatpush1.msra.mxu0 %v109
    %145 = vmatprep.subr.mxu0 0.0
    %146 = vmatpush1.msra.mxu0 %v110
    %147 = vmatprep.subr.mxu0 0.0
    %148 = vmatpush1.msra.mxu0 %v111
    %149 = vmatprep.subr.mxu0 0.0
    %150 = vmatpush1.msra.mxu0 %v112
    %151 = vmatprep.subr.mxu0 0.0
    %152 = vmatpush1.msra.mxu0 %v113
    %153 = vmatprep.subr.mxu0 0.0
    %154 = vmatpush1.msra.mxu0 0.0
    %155 = vmatprep.subr.mxu0 0.0
    %156 = vmatpush1.msra.mxu0 0.0
    %157 = vmatprep.subr.mxu0 0.0
    %158 = vmatpush1.msra.mxu0 0.0
    %159 = vmatprep.subr.mxu0 0.0
    %160 = vmatpush1.msra.mxu0 0.0
    %161 = vmatprep.subr.mxu0 0.0
    %162 = vmatpush1.msra.mxu0 0.0
    %163 = vmatprep.subr.mxu0 0.0
    %164 = vmatpush1.msra.mxu0 0.0
    %165 = vmatprep.subr.mxu0 0.0
    %166 = vmatpush1.msra.mxu0 0.0
    %167 = vmatprep.subr.mxu0 0.0
    %168 = vmatpush1.msra.mxu0 0.0
    %169 = vmatprep.subr.mxu0 0.0
    %170 = vmatpush1.msra.mxu0 0.0
    %171 = vmatprep.subr.mxu0 0.0
    %172 = vmatpush1.msra.mxu0 0.0
    %173 = vmatprep.subr.mxu0 0.0
    %174 = vmatpush1.msra.mxu0 0.0
    %175 = vmatprep.subr.mxu0 0.0
    %176 = vmatpush1.msra.mxu0 0.0
    %177 = vmatprep.subr.mxu0 0.0
    %178 = vmatpush1.msra.mxu0 0.0
    %179 = vmatprep.subr.mxu0 0.0
    %180 = vmatpush1.msra.mxu0 0.0
    %181 = vmatprep.subr.mxu0 0.0
    %182 = vmatpush1.msra.mxu0 0.0
    %183 = vmatprep.subr.mxu0 0.0
    %184 = vmatpush1.msra.mxu0 0.0
    %185 = vmatprep.mubr.f32.mxu0 0.0
    %186 = vmatmul.mubr.f32.gmra.mrb[0].mxu0 %v97
    %v187 = vpop.f32.mrb[0].mxu0
    %v188 = vadd.f32 %v119, %v187
    %v189 = vpop.f32.mrb[0].mxu0
    %190 = vdwg.mxu0
    %vm191 = vcmp.gt.f32.partialorder %v188, 0.0
    %v192 = vmul.f32 %v188, 1.442695
    %v193 = vpow.pop %v192
    %v194 = vsub.f32 %v193, 1.0
    %v195 = vsel %vm191, %v188, %v194
    %vm196 = vcmask 130048
    %197 = vst.msk [vmem:[#allocation2] sm:$0xff] %vm196, %v195
    // Predicated region
    $region18: #{tpu_custom_call.1} parent=1 // pred_check
      _
    $region19: #{tpu_custom_call.1} parent=1 // pred_check_branch
      %199 = sbr.rel (0) target = $region21
    $region20: #{tpu_custom_call.1} parent=1 // pred_region
      %s201 = ssub.s32 128, 128
      %202 = vsyncadd [#allocation3], %s201
      %s204 = sshll.u32 [#allocation2], 4
      %s205 = int_to_ptr.vmem [resolvable:$true] %s204
      %207 = dma.vmem_to_hbm [thread:$0]  %s205, 128, %s4, [#allocation3]
    $region21: #{tpu_custom_call.1} parent=1 // pred_fallthru
      _
    // Predicated region
    $region22: #{tpu_custom_call.1} parent=1 // pred_check
      _
    $region23: #{tpu_custom_call.1} parent=1 // pred_check_branch
      %209 = sbr.rel (0) target = $region25
    $region24: #{tpu_custom_call.1} parent=1 // pred_region
      %210 = dma.done [#allocation3], 128
    $region25: #{tpu_custom_call.1} parent=1 // pred_fallthru
      _
    %211 = vsyncpa [#allocation3], 1

</llo_original>
